<compile_context>
chip_gen: v7x
topology: tpu7x:2x2x1
jax: 0.10.0
libtpu: 0.0.40
codegen_flags: <defaults>
</compile_context>

<pallas_src>
import jax
import jax.numpy as jnp
from jax.experimental import pallas as pl
from jax.experimental.pallas import tpu as pltpu

MAX_LENGTH = 8
RNN_HIDDEN = 12
STR_DIM = 6
STR_SIZE = 28
NUM_CLASSES = MAX_LENGTH + 1  # 9


def order_model_kernel(x_ref, whh_ref, wout_ref, bout_ref, out_ref):
    # x_ref:    (T, Bb, H)  pre-projected inputs: emb[id] @ W_ih + b_ih + b_hh
    # whh_ref:  (H, H)      recurrent weight (pre-transposed, row-major GEMM)
    # wout_ref: (H, C), bout_ref: (1, C), out_ref: (Bb, C)
    T, Bb, H = x_ref.shape

    whh = whh_ref[...]          # load weights once
    x = x_ref[...]              # load the whole (T, Bb, H) block once

    # Elman RNN recurrence: h_t = tanh(x_t + h_{t-1} @ W_hh).  h_0 == 0, so the first
    # step needs no matmul.  T is a static Python int (=8) -> fully unrolled, static slices.
    h = jnp.tanh(x[0])
    for t in range(1, T):
        h = jnp.tanh(x[t] + jnp.dot(h, whh, preferred_element_type=jnp.float32))

    # Final Linear layer on the last hidden state.
    out_ref[...] = (jnp.dot(h, wout_ref[...], preferred_element_type=jnp.float32)
                    + bout_ref[...])


def order_model_forward(ids, params, block_b=None):
    """ids: (B, T) int32 token ids.  Returns logits (B, NUM_CLASSES) float32."""
    emb, wih, whh, b, wout, bout = params
    B, T = ids.shape
    H = whh.shape[0]

    # Fold embedding into the input projection (exact: row gather of emb @ W_ih),
    # and fold the combined bias in as well.  Gather in the wrapper (cheap XLA gather),
    # time-major so the kernel walks the leading (time) axis with static slices.
    table = emb @ wih + b                       # (V, H)
    x = table[ids.T]                            # (T, B, H) float32

    # Block the batch axis; one grid point for small B, multiple "parallel" blocks
    # (sharded across TensorCores on v7x) for large B.
    if block_b is None:
        block_b = B if B <= 512 else 512
    grid = (pl.cdiv(B, block_b),)

    out = pl.pallas_call(
        order_model_kernel,
        out_shape=jax.ShapeDtypeStruct((B, NUM_CLASSES), jnp.float32),
        grid=grid,
        in_specs=[
            pl.BlockSpec((T, block_b, H), lambda i: (0, i, 0)),
            pl.BlockSpec((H, H), lambda i: (0, 0)),
            pl.BlockSpec((H, NUM_CLASSES), lambda i: (0, 0)),
            pl.BlockSpec((1, NUM_CLASSES), lambda i: (0, 0)),
        ],
        out_specs=pl.BlockSpec((block_b, NUM_CLASSES), lambda i: (i, 0)),
        compiler_params=pltpu.CompilerParams(dimension_semantics=("parallel",)),
    )(x, whh, wout, bout)
    return out


def make_params(key):
    """Deterministic synthetic parameters matching nn.Embedding/nn.RNN/nn.Linear shapes."""
    k = jax.random.split(key, 7)
    emb = jax.random.normal(k[0], (STR_SIZE, STR_DIM), jnp.float32) * 0.5
    # PyTorch stores W_ih as (H, D) and W_hh as (H, H); we keep them pre-transposed.
    wih = jax.random.normal(k[1], (STR_DIM, RNN_HIDDEN), jnp.float32) * 0.3
    whh = jax.random.normal(k[2], (RNN_HIDDEN, RNN_HIDDEN), jnp.float32) * 0.3
    b_ih = jax.random.normal(k[3], (RNN_HIDDEN,), jnp.float32) * 0.1
    b_hh = jax.random.normal(k[4], (RNN_HIDDEN,), jnp.float32) * 0.1
    b = (b_ih + b_hh).reshape(1, RNN_HIDDEN)
    wout = jax.random.normal(k[5], (RNN_HIDDEN, NUM_CLASSES), jnp.float32) * 0.3
    bout = (jax.random.normal(k[6], (NUM_CLASSES,), jnp.float32) * 0.1
            ).reshape(1, NUM_CLASSES)
    return emb, wih, whh, b, wout, bout


def reference_forward(ids, params):
    """Pure-JAX reference of the PyTorch forward pass."""
    emb, wih, whh, b, wout, bout = params
    x = emb[ids]                                            # (B, T, D) embedding lookup
    B, T, _ = x.shape
    h = jnp.zeros((B, RNN_HIDDEN), jnp.float32)
    for t in range(T):
        h = jnp.tanh(x[:, t, :] @ wih + h @ whh + b)        # Elman RNN
    return h @ wout + bout                                  # last hidden -> Linear


if __name__ == "__main__":
    key = jax.random.PRNGKey(0)
    k_ids, k_params = jax.random.split(key)

    batch = 8  # multiple of 8 fills the f32 sublane axis; kernel handles any B
    ids = jax.random.randint(k_ids, (batch, MAX_LENGTH), 0, STR_SIZE, dtype=jnp.int32)
    params = make_params(k_params)

    y_kernel = jax.block_until_ready(order_model_forward(ids, params))
    y_ref = jax.block_until_ready(reference_forward(ids, params))

    assert y_kernel.shape == (batch, NUM_CLASSES)
    assert jnp.allclose(y_kernel, y_ref, atol=1e-4, rtol=1e-4), (y_kernel, y_ref)
    print("KERNEL_OK")
</pallas_src>

<mosaic_0001>
module attributes {stable_mosaic.version = 11 : i64} {
  func.func @order_model_kernel(%arg0: i32, %arg1: memref<8x8x12xf32, #tpu.memory_space<vmem>>, %arg2: memref<12x12xf32, #tpu.memory_space<vmem>>, %arg3: memref<12x9xf32, #tpu.memory_space<vmem>>, %arg4: memref<1x9xf32, #tpu.memory_space<vmem>>, %arg5: memref<8x9xf32, #tpu.memory_space<vmem>>) attributes {dimension_semantics = [#tpu.dimension_semantics<parallel>], iteration_bounds = array<i64: 1>, scalar_prefetch = 0 : i64, scratch_operands = 0 : i64, tpu.core_type = #tpu.core_type<tc>, window_params = [{transform_indices = @transform_0, window_bounds = array<i64: 8, 8, 12>}, {pipeline_mode = #tpu.pipeline_mode<synchronous>, transform_indices = @transform_1, window_bounds = array<i64: 12, 12>}, {pipeline_mode = #tpu.pipeline_mode<synchronous>, transform_indices = @transform_2, window_bounds = array<i64: 12, 9>}, {pipeline_mode = #tpu.pipeline_mode<synchronous>, transform_indices = @transform_3, window_bounds = array<i64: 1, 9>}, {transform_indices = @transform_4, window_bounds = array<i64: 8, 9>}]} {
    %c0 = arith.constant 0 : index
    %c0_0 = arith.constant 0 : index
    %0 = vector.load %arg2[%c0, %c0_0] : memref<12x12xf32, #tpu.memory_space<vmem>>, vector<12x12xf32>
    %c0_1 = arith.constant 0 : index
    %c0_2 = arith.constant 0 : index
    %c0_3 = arith.constant 0 : index
    %1 = vector.load %arg1[%c0_1, %c0_2, %c0_3] : memref<8x8x12xf32, #tpu.memory_space<vmem>>, vector<8x8x12xf32>
    %2 = vector.extract_strided_slice %1 {offsets = [0, 0, 0], sizes = [1, 8, 12], strides = [1, 1, 1]} : vector<8x8x12xf32> to vector<1x8x12xf32>
    %3 = vector.shape_cast %2 : vector<1x8x12xf32> to vector<8x12xf32>
    %4 = math.tanh %3 : vector<8x12xf32>
    %5 = vector.extract_strided_slice %1 {offsets = [1, 0, 0], sizes = [1, 8, 12], strides = [1, 1, 1]} : vector<8x8x12xf32> to vector<1x8x12xf32>
    %6 = vector.shape_cast %5 : vector<1x8x12xf32> to vector<8x12xf32>
    %cst = arith.constant dense<0.000000e+00> : vector<8x12xf32>
    %7 = tpu.matmul %4, %0, %cst {dimension_numbers = #tpu.dot_dimension_numbers<[1], [0], [0], [1], [0, 0, 1, 1], [], []>} : vector<8x12xf32>, vector<12x12xf32>, vector<8x12xf32> -> vector<8x12xf32>
    %8 = arith.addf %6, %7 : vector<8x12xf32>
    %9 = math.tanh %8 : vector<8x12xf32>
    %10 = vector.extract_strided_slice %1 {offsets = [2, 0, 0], sizes = [1, 8, 12], strides = [1, 1, 1]} : vector<8x8x12xf32> to vector<1x8x12xf32>
    %11 = vector.shape_cast %10 : vector<1x8x12xf32> to vector<8x12xf32>
    %cst_4 = arith.constant dense<0.000000e+00> : vector<8x12xf32>
    %12 = tpu.matmul %9, %0, %cst_4 {dimension_numbers = #tpu.dot_dimension_numbers<[1], [0], [0], [1], [0, 0, 1, 1], [], []>} : vector<8x12xf32>, vector<12x12xf32>, vector<8x12xf32> -> vector<8x12xf32>
    %13 = arith.addf %11, %12 : vector<8x12xf32>
    %14 = math.tanh %13 : vector<8x12xf32>
    %15 = vector.extract_strided_slice %1 {offsets = [3, 0, 0], sizes = [1, 8, 12], strides = [1, 1, 1]} : vector<8x8x12xf32> to vector<1x8x12xf32>
    %16 = vector.shape_cast %15 : vector<1x8x12xf32> to vector<8x12xf32>
    %cst_5 = arith.constant dense<0.000000e+00> : vector<8x12xf32>
    %17 = tpu.matmul %14, %0, %cst_5 {dimension_numbers = #tpu.dot_dimension_numbers<[1], [0], [0], [1], [0, 0, 1, 1], [], []>} : vector<8x12xf32>, vector<12x12xf32>, vector<8x12xf32> -> vector<8x12xf32>
    %18 = arith.addf %16, %17 : vector<8x12xf32>
    %19 = math.tanh %18 : vector<8x12xf32>
    %20 = vector.extract_strided_slice %1 {offsets = [4, 0, 0], sizes = [1, 8, 12], strides = [1, 1, 1]} : vector<8x8x12xf32> to vector<1x8x12xf32>
    %21 = vector.shape_cast %20 : vector<1x8x12xf32> to vector<8x12xf32>
    %cst_6 = arith.constant dense<0.000000e+00> : vector<8x12xf32>
    %22 = tpu.matmul %19, %0, %cst_6 {dimension_numbers = #tpu.dot_dimension_numbers<[1], [0], [0], [1], [0, 0, 1, 1], [], []>} : vector<8x12xf32>, vector<12x12xf32>, vector<8x12xf32> -> vector<8x12xf32>
    %23 = arith.addf %21, %22 : vector<8x12xf32>
    %24 = math.tanh %23 : vector<8x12xf32>
    %25 = vector.extract_strided_slice %1 {offsets = [5, 0, 0], sizes = [1, 8, 12], strides = [1, 1, 1]} : vector<8x8x12xf32> to vector<1x8x12xf32>
    %26 = vector.shape_cast %25 : vector<1x8x12xf32> to vector<8x12xf32>
    %cst_7 = arith.constant dense<0.000000e+00> : vector<8x12xf32>
    %27 = tpu.matmul %24, %0, %cst_7 {dimension_numbers = #tpu.dot_dimension_numbers<[1], [0], [0], [1], [0, 0, 1, 1], [], []>} : vector<8x12xf32>, vector<12x12xf32>, vector<8x12xf32> -> vector<8x12xf32>
    %28 = arith.addf %26, %27 : vector<8x12xf32>
    %29 = math.tanh %28 : vector<8x12xf32>
    %30 = vector.extract_strided_slice %1 {offsets = [6, 0, 0], sizes = [1, 8, 12], strides = [1, 1, 1]} : vector<8x8x12xf32> to vector<1x8x12xf32>
    %31 = vector.shape_cast %30 : vector<1x8x12xf32> to vector<8x12xf32>
    %cst_8 = arith.constant dense<0.000000e+00> : vector<8x12xf32>
    %32 = tpu.matmul %29, %0, %cst_8 {dimension_numbers = #tpu.dot_dimension_numbers<[1], [0], [0], [1], [0, 0, 1, 1], [], []>} : vector<8x12xf32>, vector<12x12xf32>, vector<8x12xf32> -> vector<8x12xf32>
    %33 = arith.addf %31, %32 : vector<8x12xf32>
    %34 = math.tanh %33 : vector<8x12xf32>
    %35 = vector.extract_strided_slice %1 {offsets = [7, 0, 0], sizes = [1, 8, 12], strides = [1, 1, 1]} : vector<8x8x12xf32> to vector<1x8x12xf32>
    %36 = vector.shape_cast %35 : vector<1x8x12xf32> to vector<8x12xf32>
    %cst_9 = arith.constant dense<0.000000e+00> : vector<8x12xf32>
    %37 = tpu.matmul %34, %0, %cst_9 {dimension_numbers = #tpu.dot_dimension_numbers<[1], [0], [0], [1], [0, 0, 1, 1], [], []>} : vector<8x12xf32>, vector<12x12xf32>, vector<8x12xf32> -> vector<8x12xf32>
    %38 = arith.addf %36, %37 : vector<8x12xf32>
    %39 = math.tanh %38 : vector<8x12xf32>
    %c0_10 = arith.constant 0 : index
    %c0_11 = arith.constant 0 : index
    %40 = vector.load %arg3[%c0_10, %c0_11] : memref<12x9xf32, #tpu.memory_space<vmem>>, vector<12x9xf32>
    %cst_12 = arith.constant dense<0.000000e+00> : vector<8x9xf32>
    %41 = tpu.matmul %39, %40, %cst_12 {dimension_numbers = #tpu.dot_dimension_numbers<[1], [0], [0], [1], [0, 0, 1, 1], [], []>} : vector<8x12xf32>, vector<12x9xf32>, vector<8x9xf32> -> vector<8x9xf32>
    %c0_13 = arith.constant 0 : index
    %c0_14 = arith.constant 0 : index
    %42 = vector.load %arg4[%c0_13, %c0_14] : memref<1x9xf32, #tpu.memory_space<vmem>>, vector<1x9xf32>
    %43 = vector.broadcast %42 : vector<1x9xf32> to vector<8x9xf32>
    %44 = arith.addf %41, %43 : vector<8x9xf32>
    %c0_15 = arith.constant 0 : index
    %c0_16 = arith.constant 0 : index
    %45 = vector.load %arg5[%c0_15, %c0_16] : memref<8x9xf32, #tpu.memory_space<vmem>>, vector<8x9xf32>
    tpu.vector_store %arg5[%c0_15, %c0_16], %44 {strides = array<i32>} : memref<8x9xf32, #tpu.memory_space<vmem>>, vector<8x9xf32>,
    return
  }
  func.func @transform_0(%arg0: i32) -> (i32, i32, i32) {
    %c0_i32 = arith.constant 0 : i32
    %c0_i32_0 = arith.constant 0 : i32
    %c0_i32_1 = arith.constant 0 : i32
    return %c0_i32, %arg0, %c0_i32_0 : i32, i32, i32
  }
  func.func @transform_1(%arg0: i32) -> (i32, i32) {
    %c0_i32 = arith.constant 0 : i32
    %c0_i32_0 = arith.constant 0 : i32
    %c0_i32_1 = arith.constant 0 : i32
    return %c0_i32, %c0_i32_0 : i32, i32
  }
  func.func @transform_2(%arg0: i32) -> (i32, i32) {
    %c0_i32 = arith.constant 0 : i32
    %c0_i32_0 = arith.constant 0 : i32
    %c0_i32_1 = arith.constant 0 : i32
    return %c0_i32, %c0_i32_0 : i32, i32
  }
  func.func @transform_3(%arg0: i32) -> (i32, i32) {
    %c0_i32 = arith.constant 0 : i32
    %c0_i32_0 = arith.constant 0 : i32
    %c0_i32_1 = arith.constant 0 : i32
    return %c0_i32, %c0_i32_0 : i32, i32
  }
  func.func @transform_4(%arg0: i32) -> (i32, i32) {
    %c0_i32 = arith.constant 0 : i32
    %c0_i32_0 = arith.constant 0 : i32
    return %arg0, %c0_i32 : i32, i32
  }
}

</mosaic_0001>

<llo_original>
// kernel: tpu_custom_call.1
$region0: #{tpu_custom_call.1}
  #allocation0 [shape = 'u32[]', space=smem, size = 0x4, offset = 0x4, fixed_abs, tag = 'smem constant byte address 0x4 - core index']
  #allocation1 [shape = 'u32[144,128]{1,0:T(1,128)}', space=vmem, size = 0x12000, scoped, tag = 'internal scratch']
  %s0 = inlined_call_operand.hbm [shape: f32[8,8,12], index: 0, kind: input, shape index: {}]
  %s1 = inlined_call_operand.hbm [shape: f32[12,12], index: 1, kind: input, shape index: {}]
  %s2 = inlined_call_operand.hbm [shape: f32[12,9], index: 2, kind: input, shape index: {}]
  %s3 = inlined_call_operand.vmem [shape: f32[1,9], index: 3, kind: input, shape index: {}]
  %s4 = inlined_call_operand.hbm [shape: f32[8,9], index: 4, kind: output, shape index: {}]
  %s5 = sld [smem:[#allocation0]]
  $region38: #{tpu_custom_call.1} parent=0
    _
  %s7 = ssub.s32 1, %s5
  %s8 = scalar_select 0, %s7, %s5
  $region1: #{tpu_custom_call.1} parent=0
    #allocation2 [shape = 'u8[32768]{0}', space=vmem, size = 0x8000, scoped, tag = 'input window, operand 0, single buffered']
    #allocation3 [shape = 's32[1]{0}', space=sflag, size = 0x4, scoped, tag = 'scoped memory for tpu_custom_call.1']
    #allocation4 [shape = 's32[1]{0}', space=sflag, size = 0x4, scoped, tag = 'scoped memory for tpu_custom_call.1']
    #allocation5 [shape = 'u8[8192]{0}', space=vmem, size = 0x2000, scoped, tag = 'input window, operand 1, single buffered']
    #allocation6 [shape = 's32[1]{0}', space=sflag, size = 0x4, scoped, tag = 'scoped memory for tpu_custom_call.1']
    #allocation7 [shape = 'u8[8192]{0}', space=vmem, size = 0x2000, scoped, tag = 'input window, operand 2, single buffered']
    #allocation8 [shape = 'u8[4096]{0}', space=vmem, size = 0x1000, scoped, tag = 'output window, operand 0, single buffered']
    %9 = vsyncpa [#allocation3], 0
    %10 = vsyncpa [#allocation6], 0
    %11 = vsyncpa [#allocation4], 0
    // Predicated region
    $region2: #{tpu_custom_call.1} parent=1 // pred_check
      _
    $region3: #{tpu_custom_call.1} parent=1 // pred_check_branch
      %13 = sbr.rel (0) target = $region5
    $region4: #{tpu_custom_call.1} parent=1 // pred_region
      %s15 = ssub.s32 1024, 1024
      %16 = vsyncadd [#allocation3], %s15
      %s17 = sshll.u32 [#allocation2], 4
      %s18 = int_to_ptr.vmem [resolvable:$true] %s17
      %23 = dma.hbm_to_vmem [thread:$0]  %s0, 1024, %s18, [#allocation3], 128, 128, 8
    $region5: #{tpu_custom_call.1} parent=1 // pred_fallthru
      _
    // Predicated region
    $region6: #{tpu_custom_call.1} parent=1 // pred_check
      _
    $region7: #{tpu_custom_call.1} parent=1 // pred_check_branch
      %25 = sbr.rel (0) target = $region9
    $region8: #{tpu_custom_call.1} parent=1 // pred_region
      %s27 = ssub.s32 256, 256
      %28 = vsyncadd [#allocation6], %s27
      %s29 = sshll.u32 [#allocation5], 4
      %s30 = int_to_ptr.vmem [resolvable:$true] %s29
      %35 = dma.hbm_to_vmem [thread:$0]  %s1, 256, %s30, [#allocation6], 128, 128, 8
    $region9: #{tpu_custom_call.1} parent=1 // pred_fallthru
      _
    // Predicated region
    $region10: #{tpu_custom_call.1} parent=1 // pred_check
      _
    $region11: #{tpu_custom_call.1} parent=1 // pred_check_branch
      %37 = sbr.rel (0) target = $region13
    $region12: #{tpu_custom_call.1} parent=1 // pred_region
      %s39 = ssub.s32 256, 256
      %40 = vsyncadd [#allocation6], %s39
      %s41 = sshll.u32 [#allocation7], 4
      %s42 = int_to_ptr.vmem [resolvable:$true] %s41
      %47 = dma.hbm_to_vmem [thread:$0]  %s2, 256, %s42, [#allocation6], 128, 128, 8
    $region13: #{tpu_custom_call.1} parent=1 // pred_fallthru
      _
    // Predicated region
    $region14: #{tpu_custom_call.1} parent=1 // pred_check
      _
    $region15: #{tpu_custom_call.1} parent=1 // pred_check_branch
      %49 = sbr.rel (0) target = $region17
    $region16: #{tpu_custom_call.1} parent=1 // pred_region
      _
    $region17: #{tpu_custom_call.1} parent=1 // pred_fallthru
      _
    // Predicated region
    $region18: #{tpu_custom_call.1} parent=1 // pred_check
      _
    $region19: #{tpu_custom_call.1} parent=1 // pred_check_branch
      %51 = sbr.rel (0) target = $region21
    $region20: #{tpu_custom_call.1} parent=1 // pred_region
      %52 = dma.done [#allocation3], 1024
    $region21: #{tpu_custom_call.1} parent=1 // pred_fallthru
      _
    // Predicated region
    $region22: #{tpu_custom_call.1} parent=1 // pred_check
      _
    $region23: #{tpu_custom_call.1} parent=1 // pred_check_branch
      %54 = sbr.rel (0) target = $region25
    $region24: #{tpu_custom_call.1} parent=1 // pred_region
      %55 = dma.done [#allocation6], 256
    $region25: #{tpu_custom_call.1} parent=1 // pred_fallthru
      _
    // Predicated region
    $region26: #{tpu_custom_call.1} parent=1 // pred_check
      _
    $region27: #{tpu_custom_call.1} parent=1 // pred_check_branch
      %57 = sbr.rel (0) target = $region29
    $region28: #{tpu_custom_call.1} parent=1 // pred_region
      %58 = dma.done [#allocation6], 256
    $region29: #{tpu_custom_call.1} parent=1 // pred_fallthru
      _
    %v59 = vld [vmem:[#allocation5] sm:$0xff]
    %v60 = vld [vmem:[#allocation5 + $0x8] sm:$0xf]
    %v61 = vld [vmem:[#allocation2] sm:$0xff]
    %v62 = vld [vmem:[#allocation2 + $0x8] sm:$0xff]
    %v63 = vld [vmem:[#allocation2 + $0x10] sm:$0xff]
    %v64 = vld [vmem:[#allocation2 + $0x18] sm:$0xff]
    %v65 = vld [vmem:[#allocation2 + $0x20] sm:$0xff]
    %v66 = vld [vmem:[#allocation2 + $0x28] sm:$0xff]
    %v67 = vld [vmem:[#allocation2 + $0x30] sm:$0xff]
    %v68 = vld [vmem:[#allocation2 + $0x38] sm:$0xff]
    %v69 = vtanh.pop %v61
    %vm70 = vcmask 97280
    %v72 = vsel %vm70, %v69, 0
    %vm74 = vcmask 1043456
    %v76 = vsel %vm74, %v60, 0
    %78 = vmatprep.subr.mxu0 0.0
    %79 = vmatpush1.msra.mxu0 %v59
    %80 = vmatprep.subr.mxu0 0.0
    %81 = vmatpush1.msra.mxu0 %v76
    %82 = vmatprep.subr.mxu0 0.0
    %83 = vmatpush1.msra.mxu0 0.0
    %84 = vmatprep.subr.mxu0 0.0
    %85 = vmatpush1.msra.mxu0 0.0
    %86 = vmatprep.subr.mxu0 0.0
    %87 = vmatpush1.msra.mxu0 0.0
    %88 = vmatprep.subr.mxu0 0.0
    %89 = vmatpush1.msra.mxu0 0.0
    %90 = vmatprep.subr.mxu0 0.0
    %91 = vmatpush1.msra.mxu0 0.0
    %92 = vmatprep.subr.mxu0 0.0
    %93 = vmatpush1.msra.mxu0 0.0
    %94 = vmatprep.subr.mxu0 0.0
    %95 = vmatpush1.msra.mxu0 0.0
    %96 = vmatprep.subr.mxu0 0.0
    %97 = vmatpush1.msra.mxu0 0.0
    %98 = vmatprep.subr.mxu0 0.0
    %99 = vmatpush1.msra.mxu0 0.0
    %100 = vmatprep.subr.mxu0 0.0
    %101 = vmatpush1.msra.mxu0 0.0
    %102 = vmatprep.subr.mxu0 0.0
    %103 = vmatpush1.msra.mxu0 0.0
    %104 = vmatprep.subr.mxu0 0.0
    %105 = vmatpush1.msra.mxu0 0.0
    %106 = vmatprep.subr.mxu0 0.0
    %107 = vmatpush1.msra.mxu0 0.0
    %108 = vmatprep.subr.mxu0 0.0
    %109 = vmatpush1.msra.mxu0 0.0
    %110 = vmatprep.subr.mxu0 0.0
    %111 = vmatpush1.msra.mxu0 0.0
    %112 = vmatprep.subr.mxu0 0.0
    %113 = vmatpush1.msra.mxu0 0.0
    %114 = vmatprep.subr.mxu0 0.0
    %115 = vmatpush1.msra.mxu0 0.0
    %116 = vmatprep.subr.mxu0 0.0
    %117 = vmatpush1.msra.mxu0 0.0
    %118 = vmatprep.subr.mxu0 0.0
    %119 = vmatpush1.msra.mxu0 0.0
    %120 = vmatprep.subr.mxu0 0.0
    %121 = vmatpush1.msra.mxu0 0.0
    %122 = vmatprep.subr.mxu0 0.0
    %123 = vmatpush1.msra.mxu0 0.0
    %124 = vmatprep.subr.mxu0 0.0
    %125 = vmatpush1.msra.mxu0 0.0
    %126 = vmatprep.subr.mxu0 0.0
    %127 = vmatpush1.msra.mxu0 0.0
    %128 = vmatprep.subr.mxu0 0.0
    %129 = vmatpush1.msra.mxu0 0.0
    %130 = vmatprep.subr.mxu0 0.0
    %131 = vmatpush1.msra.mxu0 0.0
    %132 = vmatprep.subr.mxu0 0.0
    %133 = vmatpush1.msra.mxu0 0.0
    %134 = vmatprep.subr.mxu0 0.0
    %135 = vmatpush1.msra.mxu0 0.0
    %136 = vmatprep.subr.mxu0 0.0
    %137 = vmatpush1.msra.mxu0 0.0
    %138 = vmatprep.subr.mxu0 0.0
    %139 = vmatpush1.msra.mxu0 0.0
    %140 = vmatprep.subr.mxu0 0.0
    %141 = vmatpush1.msra.mxu0 0.0
    %142 = vmatprep.mubr.f32.mxu0 0.0
    %143 = vmatmul.mubr.f32.gmra.mrb[0].mxu0 %v72
    %v144 = vpop.f32.mrb[0].mxu0
    %v145 = vadd.f32 0.0, %v144
    %v146 = vpop.f32.mrb[0].mxu0
    %147 = vdwg.mxu0
    %v148 = vadd.f32 %v62, %v145
    %v149 = vtanh.pop %v148
    %v151 = vsel %vm70, %v149, 0
    %153 = vmatprep.subr.mxu0 0.0
    %154 = vmatpush1.msra.mxu0 %v59
    %155 = vmatprep.subr.mxu0 0.0
    %156 = vmatpush1.msra.mxu0 %v76
    %157 = vmatprep.subr.mxu0 0.0
    %158 = vmatpush1.msra.mxu0 0.0
    %159 = vmatprep.subr.mxu0 0.0
    %160 = vmatpush1.msra.mxu0 0.0
    %161 = vmatprep.subr.mxu0 0.0
    %162 = vmatpush1.msra.mxu0 0.0
    %163 = vmatprep.subr.mxu0 0.0
    %164 = vmatpush1.msra.mxu0 0.0
    %165 = vmatprep.subr.mxu0 0.0
    %166 = vmatpush1.msra.mxu0 0.0
    %167 = vmatprep.subr.mxu0 0.0
    %168 = vmatpush1.msra.mxu0 0.0
    %169 = vmatprep.subr.mxu0 0.0
    %170 = vmatpush1.msra.mxu0 0.0
    %171 = vmatprep.subr.mxu0 0.0
    %172 = vmatpush1.msra.mxu0 0.0
    %173 = vmatprep.subr.mxu0 0.0
    %174 = vmatpush1.msra.mxu0 0.0
    %175 = vmatprep.subr.mxu0 0.0
    %176 = vmatpush1.msra.mxu0 0.0
    %177 = vmatprep.subr.mxu0 0.0
    %178 = vmatpush1.msra.mxu0 0.0
    %179 = vmatprep.subr.mxu0 0.0
    %180 = vmatpush1.msra.mxu0 0.0
    %181 = vmatprep.subr.mxu0 0.0
    %182 = vmatpush1.msra.mxu0 0.0
    %183 = vmatprep.subr.mxu0 0.0
    %184 = vmatpush1.msra.mxu0 0.0
    %185 = vmatprep.subr.mxu0 0.0
    %186 = vmatpush1.msra.mxu0 0.0
    %187 = vmatprep.subr.mxu0 0.0
    %188 = vmatpush1.msra.mxu0 0.0
    %189 = vmatprep.subr.mxu0 0.0
    %190 = vmatpush1.msra.mxu0 0.0
    %191 = vmatprep.subr.mxu0 0.0
    %192 = vmatpush1.msra.mxu0 0.0
    %193 = vmatprep.subr.mxu0 0.0
    %194 = vmatpush1.msra.mxu0 0.0
    %195 = vmatprep.subr.mxu0 0.0
    %196 = vmatpush1.msra.mxu0 0.0
    %197 = vmatprep.subr.mxu0 0.0
    %198 = vmatpush1.msra.mxu0 0.0
    %199 = vmatprep.subr.mxu0 0.0
    %200 = vmatpush1.msra.mxu0 0.0
    %201 = vmatprep.subr.mxu0 0.0
    %202 = vmatpush1.msra.mxu0 0.0
    %203 = vmatprep.subr.mxu0 0.0
    %204 = vmatpush1.msra.mxu0 0.0
    %205 = vmatprep.subr.mxu0 0.0
    %206 = vmatpush1.msra.mxu0 0.0
    %207 = vmatprep.subr.mxu0 0.0
    %208 = vmatpush1.msra.mxu0 0.0
    %209 = vmatprep.subr.mxu0 0.0
    %210 = vmatpush1.msra.mxu0 0.0
    %211 = vmatprep.subr.mxu0 0.0
    %212 = vmatpush1.msra.mxu0 0.0
    %213 = vmatprep.subr.mxu0 0.0
    %214 = vmatpush1.msra.mxu0 0.0
    %215 = vmatprep.subr.mxu0 0.0
    %216 = vmatpush1.msra.mxu0 0.0
    %217 = vmatprep.mubr.f32.mxu0 0.0
    %218 = vmatmul.mubr.f32.gmra.mrb[0].mxu0 %v151
    %v219 = vpop.f32.mrb[0].mxu0
    %v220 = vadd.f32 0.0, %v219
    %v221 = vpop.f32.mrb[0].mxu0
    %222 = vdwg.mxu0
    %v223 = vadd.f32 %v63, %v220
    %v224 = vtanh.pop %v223
    %v226 = vsel %vm70, %v224, 0
    %228 = vmatprep.subr.mxu0 0.0
    %229 = vmatpush1.msra.mxu0 %v59
    %230 = vmatprep.subr.mxu0 0.0
    %231 = vmatpush1.msra.mxu0 %v76
    %232 = vmatprep.subr.mxu0 0.0
    %233 = vmatpush1.msra.mxu0 0.0
    %234 = vmatprep.subr.mxu0 0.0
    %235 = vmatpush1.msra.mxu0 0.0
    %236 = vmatprep.subr.mxu0 0.0
    %237 = vmatpush1.msra.mxu0 0.0
    %238 = vmatprep.subr.mxu0 0.0
    %239 = vmatpush1.msra.mxu0 0.0
    %240 = vmatprep.subr.mxu0 0.0
    %241 = vmatpush1.msra.mxu0 0.0
    %242 = vmatprep.subr.mxu0 0.0
    %243 = vmatpush1.msra.mxu0 0.0
    %244 = vmatprep.subr.mxu0 0.0
    %245 = vmatpush1.msra.mxu0 0.0
    %246 = vmatprep.subr.mxu0 0.0
    %247 = vmatpush1.msra.mxu0 0.0
    %248 = vmatprep.subr.mxu0 0.0
    %249 = vmatpush1.msra.mxu0 0.0
    %250 = vmatprep.subr.mxu0 0.0
    %251 = vmatpush1.msra.mxu0 0.0
    %252 = vmatprep.subr.mxu0 0.0
    %253 = vmatpush1.msra.mxu0 0.0
    %254 = vmatprep.subr.mxu0 0.0
    %255 = vmatpush1.msra.mxu0 0.0
    %256 = vmatprep.subr.mxu0 0.0
    %257 = vmatpush1.msra.mxu0 0.0
    %258 = vmatprep.subr.mxu0 0.0
    %259 = vmatpush1.msra.mxu0 0.0
    %260 = vmatprep.subr.mxu0 0.0
    %261 = vmatpush1.msra.mxu0 0.0
    %262 = vmatprep.subr.mxu0 0.0
    %263 = vmatpush1.msra.mxu0 0.0
    %264 = vmatprep.subr.mxu0 0.0
    %265 = vmatpush1.msra.mxu0 0.0
    %266 = vmatprep.subr.mxu0 0.0
    %267 = vmatpush1.msra.mxu0 0.0
    %268 = vmatprep.subr.mxu0 0.0
    %269 = vmatpush1.msra.mxu0 0.0
    %270 = vmatprep.subr.mxu0 0.0
    %271 = vmatpush1.msra.mxu0 0.0
    %272 = vmatprep.subr.mxu0 0.0
    %273 = vmatpush1.msra.mxu0 0.0
    %274 = vmatprep.subr.mxu0 0.0
    %275 = vmatpush1.msra.mxu0 0.0
    %276 = vmatprep.subr.mxu0 0.0
    %277 = vmatpush1.msra.mxu0 0.0
    %278 = vmatprep.subr.mxu0 0.0
    %279 = vmatpush1.msra.mxu0 0.0
    %280 = vmatprep.subr.mxu0 0.0
    %281 = vmatpush1.msra.mxu0 0.0
    %282 = vmatprep.subr.mxu0 0.0
    %283 = vmatpush1.msra.mxu0 0.0
    %284 = vmatprep.subr.mxu0 0.0
    %285 = vmatpush1.msra.mxu0 0.0
    %286 = vmatprep.subr.mxu0 0.0
    %287 = vmatpush1.msra.mxu0 0.0
    %288 = vmatprep.subr.mxu0 0.0
    %289 = vmatpush1.msra.mxu0 0.0
    %290 = vmatprep.subr.mxu0 0.0
    %291 = vmatpush1.msra.mxu0 0.0
    %292 = vmatprep.mubr.f32.mxu0 0.0
    %293 = vmatmul.mubr.f32.gmra.mrb[0].mxu0 %v226
    %v294 = vpop.f32.mrb[0].mxu0
    %v295 = vadd.f32 0.0, %v294
    %v296 = vpop.f32.mrb[0].mxu0
    %297 = vdwg.mxu0
    %v298 = vadd.f32 %v64, %v295
    %v299 = vtanh.pop %v298
    %v301 = vsel %vm70, %v299, 0
    %303 = vmatprep.subr.mxu0 0.0
    %304 = vmatpush1.msra.mxu0 %v59
    %305 = vmatprep.subr.mxu0 0.0
    %306 = vmatpush1.msra.mxu0 %v76
    %307 = vmatprep.subr.mxu0 0.0
    %308 = vmatpush1.msra.mxu0 0.0
    %309 = vmatprep.subr.mxu0 0.0
    %310 = vmatpush1.msra.mxu0 0.0
    %311 = vmatprep.subr.mxu0 0.0
    %312 = vmatpush1.msra.mxu0 0.0
    %313 = vmatprep.subr.mxu0 0.0
    %314 = vmatpush1.msra.mxu0 0.0
    %315 = vmatprep.subr.mxu0 0.0
    %316 = vmatpush1.msra.mxu0 0.0
    %317 = vmatprep.subr.mxu0 0.0
    %318 = vmatpush1.msra.mxu0 0.0
    %319 = vmatprep.subr.mxu0 0.0
    %320 = vmatpush1.msra.mxu0 0.0
    %321 = vmatprep.subr.mxu0 0.0
    %322 = vmatpush1.msra.mxu0 0.0
    %323 = vmatprep.subr.mxu0 0.0
    %324 = vmatpush1.msra.mxu0 0.0
    %325 = vmatprep.subr.mxu0 0.0
    %326 = vmatpush1.msra.mxu0 0.0
    %327 = vmatprep.subr.mxu0 0.0
    %328 = vmatpush1.msra.mxu0 0.0
    %329 = vmatprep.subr.mxu0 0.0
    %330 = vmatpush1.msra.mxu0 0.0
    %331 = vmatprep.subr.mxu0 0.0
    %332 = vmatpush1.msra.mxu0 0.0
    %333 = vmatprep.subr.mxu0 0.0
    %334 = vmatpush1.msra.mxu0 0.0
    %335 = vmatprep.subr.mxu0 0.0
    %336 = vmatpush1.msra.mxu0 0.0
    %337 = vmatprep.subr.mxu0 0.0
    %338 = vmatpush1.msra.mxu0 0.0
    %339 = vmatprep.subr.mxu0 0.0
    %340 = vmatpush1.msra.mxu0 0.0
    %341 = vmatprep.subr.mxu0 0.0
    %342 = vmatpush1.msra.mxu0 0.0
    %343 = vmatprep.subr.mxu0 0.0
    %344 = vmatpush1.msra.mxu0 0.0
    %345 = vmatprep.subr.mxu0 0.0
    %346 = vmatpush1.msra.mxu0 0.0
    %347 = vmatprep.subr.mxu0 0.0
    %348 = vmatpush1.msra.mxu0 0.0
    %349 = vmatprep.subr.mxu0 0.0
    %350 = vmatpush1.msra.mxu0 0.0
    %351 = vmatprep.subr.mxu0 0.0
    %352 = vmatpush1.msra.mxu0 0.0
    %353 = vmatprep.subr.mxu0 0.0
    %354 = vmatpush1.msra.mxu0 0.0
    %355 = vmatprep.subr.mxu0 0.0
    %356 = vmatpush1.msra.mxu0 0.0
    %357 = vmatprep.subr.mxu0 0.0
    %358 = vmatpush1.msra.mxu0 0.0
    %359 = vmatprep.subr.mxu0 0.0
    %360 = vmatpush1.msra.mxu0 0.0
    %361 = vmatprep.subr.mxu0 0.0
    %362 = vmatpush1.msra.mxu0 0.0
    %363 = vmatprep.subr.mxu0 0.0
    %364 = vmatpush1.msra.mxu0 0.0
    %365 = vmatprep.subr.mxu0 0.0
    %366 = vmatpush1.msra.mxu0 0.0
    %367 = vmatprep.mubr.f32.mxu0 0.0
    %368 = vmatmul.mubr.f32.gmra.mrb[0].mxu0 %v301
    %v369 = vpop.f32.mrb[0].mxu0
    %v370 = vadd.f32 0.0, %v369
    %v371 = vpop.f32.mrb[0].mxu0
    %372 = vdwg.mxu0
    %v373 = vadd.f32 %v65, %v370
    %v374 = vtanh.pop %v373
    %v376 = vsel %vm70, %v374, 0
    %378 = vmatprep.subr.mxu0 0.0
    %379 = vmatpush1.msra.mxu0 %v59
    %380 = vmatprep.subr.mxu0 0.0
    %381 = vmatpush1.msra.mxu0 %v76
    %382 = vmatprep.subr.mxu0 0.0
    %383 = vmatpush1.msra.mxu0 0.0
    %384 = vmatprep.subr.mxu0 0.0
    %385 = vmatpush1.msra.mxu0 0.0
    %386 = vmatprep.subr.mxu0 0.0
    %387 = vmatpush1.msra.mxu0 0.0
    %388 = vmatprep.subr.mxu0 0.0
    %389 = vmatpush1.msra.mxu0 0.0
    %390 = vmatprep.subr.mxu0 0.0
    %391 = vmatpush1.msra.mxu0 0.0
    %392 = vmatprep.subr.mxu0 0.0
    %393 = vmatpush1.msra.mxu0 0.0
    %394 = vmatprep.subr.mxu0 0.0
    %395 = vmatpush1.msra.mxu0 0.0
    %396 = vmatprep.subr.mxu0 0.0
    %397 = vmatpush1.msra.mxu0 0.0
    %398 = vmatprep.subr.mxu0 0.0
    %399 = vmatpush1.msra.mxu0 0.0
    %400 = vmatprep.subr.mxu0 0.0
    %401 = vmatpush1.msra.mxu0 0.0
    %402 = vmatprep.subr.mxu0 0.0
    %403 = vmatpush1.msra.mxu0 0.0
    %404 = vmatprep.subr.mxu0 0.0
    %405 = vmatpush1.msra.mxu0 0.0
    %406 = vmatprep.subr.mxu0 0.0
    %407 = vmatpush1.msra.mxu0 0.0
    %408 = vmatprep.subr.mxu0 0.0
    %409 = vmatpush1.msra.mxu0 0.0
    %410 = vmatprep.subr.mxu0 0.0
    %411 = vmatpush1.msra.mxu0 0.0
    %412 = vmatprep.subr.mxu0 0.0
    %413 = vmatpush1.msra.mxu0 0.0
    %414 = vmatprep.subr.mxu0 0.0
    %415 = vmatpush1.msra.mxu0 0.0
    %416 = vmatprep.subr.mxu0 0.0
    %417 = vmatpush1.msra.mxu0 0.0
    %418 = vmatprep.subr.mxu0 0.0
    %419 = vmatpush1.msra.mxu0 0.0
    %420 = vmatprep.subr.mxu0 0.0
    %421 = vmatpush1.msra.mxu0 0.0
    %422 = vmatprep.subr.mxu0 0.0
    %423 = vmatpush1.msra.mxu0 0.0
    %424 = vmatprep.subr.mxu0 0.0
    %425 = vmatpush1.msra.mxu0 0.0
    %426 = vmatprep.subr.mxu0 0.0
    %427 = vmatpush1.msra.mxu0 0.0
    %428 = vmatprep.subr.mxu0 0.0
    %429 = vmatpush1.msra.mxu0 0.0
    %430 = vmatprep.subr.mxu0 0.0
    %431 = vmatpush1.msra.mxu0 0.0
    %432 = vmatprep.subr.mxu0 0.0
    %433 = vmatpush1.msra.mxu0 0.0
    %434 = vmatprep.subr.mxu0 0.0
    %435 = vmatpush1.msra.mxu0 0.0
    %436 = vmatprep.subr.mxu0 0.0
    %437 = vmatpush1.msra.mxu0 0.0
    %438 = vmatprep.subr.mxu0 0.0
    %439 = vmatpush1.msra.mxu0 0.0
    %440 = vmatprep.subr.mxu0 0.0
    %441 = vmatpush1.msra.mxu0 0.0
    %442 = vmatprep.mubr.f32.mxu0 0.0
    %443 = vmatmul.mubr.f32.gmra.mrb[0].mxu0 %v376
    %v444 = vpop.f32.mrb[0].mxu0
    %v445 = vadd.f32 0.0, %v444
    %v446 = vpop.f32.mrb[0].mxu0
    %447 = vdwg.mxu0
    %v448 = vadd.f32 %v66, %v445
    %v449 = vtanh.pop %v448
    %v451 = vsel %vm70, %v449, 0
    %453 = vmatprep.subr.mxu0 0.0
    %454 = vmatpush1.msra.mxu0 %v59
    %455 = vmatprep.subr.mxu0 0.0
    %456 = vmatpush1.msra.mxu0 %v76
    %457 = vmatprep.subr.mxu0 0.0
    %458 = vmatpush1.msra.mxu0 0.0
    %459 = vmatprep.subr.mxu0 0.0
    %460 = vmatpush1.msra.mxu0 0.0
    %461 = vmatprep.subr.mxu0 0.0
    %462 = vmatpush1.msra.mxu0 0.0
    %463 = vmatprep.subr.mxu0 0.0
    %464 = vmatpush1.msra.mxu0 0.0
    %465 = vmatprep.subr.mxu0 0.0
    %466 = vmatpush1.msra.mxu0 0.0
    %467 = vmatprep.subr.mxu0 0.0
    %468 = vmatpush1.msra.mxu0 0.0
    %469 = vmatprep.subr.mxu0 0.0
    %470 = vmatpush1.msra.mxu0 0.0
    %471 = vmatprep.subr.mxu0 0.0
    %472 = vmatpush1.msra.mxu0 0.0
    %473 = vmatprep.subr.mxu0 0.0
    %474 = vmatpush1.msra.mxu0 0.0
    %475 = vmatprep.subr.mxu0 0.0
    %476 = vmatpush1.msra.mxu0 0.0
    %477 = vmatprep.subr.mxu0 0.0
    %478 = vmatpush1.msra.mxu0 0.0
    %479 = vmatprep.subr.mxu0 0.0
    %480 = vmatpush1.msra.mxu0 0.0
    %481 = vmatprep.subr.mxu0 0.0
    %482 = vmatpush1.msra.mxu0 0.0
    %483 = vmatprep.subr.mxu0 0.0
    %484 = vmatpush1.msra.mxu0 0.0
    %485 = vmatprep.subr.mxu0 0.0
    %486 = vmatpush1.msra.mxu0 0.0
    %487 = vmatprep.subr.mxu0 0.0
    %488 = vmatpush1.msra.mxu0 0.0
    %489 = vmatprep.subr.mxu0 0.0
    %490 = vmatpush1.msra.mxu0 0.0
    %491 = vmatprep.subr.mxu0 0.0
    %492 = vmatpush1.msra.mxu0 0.0
    %493 = vmatprep.subr.mxu0 0.0
    %494 = vmatpush1.msra.mxu0 0.0
    %495 = vmatprep.subr.mxu0 0.0
    %496 = vmatpush1.msra.mxu0 0.0
    %497 = vmatprep.subr.mxu0 0.0
    %498 = vmatpush1.msra.mxu0 0.0
    %499 = vmatprep.subr.mxu0 0.0
    %500 = vmatpush1.msra.mxu0 0.0
    %501 = vmatprep.subr.mxu0 0.0
    %502 = vmatpush1.msra.mxu0 0.0
    %503 = vmatprep.subr.mxu0 0.0
    %504 = vmatpush1.msra.mxu0 0.0
    %505 = vmatprep.subr.mxu0 0.0
    %506 = vmatpush1.msra.mxu0 0.0
    %507 = vmatprep.subr.mxu0 0.0
    %508 = vmatpush1.msra.mxu0 0.0
    %509 = vmatprep.subr.mxu0 0.0
    %510 = vmatpush1.msra.mxu0 0.0
    %511 = vmatprep.subr.mxu0 0.0
    %512 = vmatpush1.msra.mxu0 0.0
    %513 = vmatprep.subr.mxu0 0.0
    %514 = vmatpush1.msra.mxu0 0.0
    %515 = vmatprep.subr.mxu0 0.0
    %516 = vmatpush1.msra.mxu0 0.0
    %517 = vmatprep.mubr.f32.mxu0 0.0
    %518 = vmatmul.mubr.f32.gmra.mrb[0].mxu0 %v451
    %v519 = vpop.f32.mrb[0].mxu0
    %v520 = vadd.f32 0.0, %v519
    %v521 = vpop.f32.mrb[0].mxu0
    %522 = vdwg.mxu0
    %v523 = vadd.f32 %v67, %v520
    %v524 = vtanh.pop %v523
    %v526 = vsel %vm70, %v524, 0
    %528 = vmatprep.subr.mxu0 0.0
    %529 = vmatpush1.msra.mxu0 %v59
    %530 = vmatprep.subr.mxu0 0.0
    %531 = vmatpush1.msra.mxu0 %v76
    %532 = vmatprep.subr.mxu0 0.0
    %533 = vmatpush1.msra.mxu0 0.0
    %534 = vmatprep.subr.mxu0 0.0
    %535 = vmatpush1.msra.mxu0 0.0
    %536 = vmatprep.subr.mxu0 0.0
    %537 = vmatpush1.msra.mxu0 0.0
    %538 = vmatprep.subr.mxu0 0.0
    %539 = vmatpush1.msra.mxu0 0.0
    %540 = vmatprep.subr.mxu0 0.0
    %541 = vmatpush1.msra.mxu0 0.0
    %542 = vmatprep.subr.mxu0 0.0
    %543 = vmatpush1.msra.mxu0 0.0
    %544 = vmatprep.subr.mxu0 0.0
    %545 = vmatpush1.msra.mxu0 0.0
    %546 = vmatprep.subr.mxu0 0.0
    %547 = vmatpush1.msra.mxu0 0.0
    %548 = vmatprep.subr.mxu0 0.0
    %549 = vmatpush1.msra.mxu0 0.0
    %550 = vmatprep.subr.mxu0 0.0
    %551 = vmatpush1.msra.mxu0 0.0
    %552 = vmatprep.subr.mxu0 0.0
    %553 = vmatpush1.msra.mxu0 0.0
    %554 = vmatprep.subr.mxu0 0.0
    %555 = vmatpush1.msra.mxu0 0.0
    %556 = vmatprep.subr.mxu0 0.0
    %557 = vmatpush1.msra.mxu0 0.0
    %558 = vmatprep.subr.mxu0 0.0
    %559 = vmatpush1.msra.mxu0 0.0
    %560 = vmatprep.subr.mxu0 0.0
    %561 = vmatpush1.msra.mxu0 0.0
    %562 = vmatprep.subr.mxu0 0.0
    %563 = vmatpush1.msra.mxu0 0.0
    %564 = vmatprep.subr.mxu0 0.0
    %565 = vmatpush1.msra.mxu0 0.0
    %566 = vmatprep.subr.mxu0 0.0
    %567 = vmatpush1.msra.mxu0 0.0
    %568 = vmatprep.subr.mxu0 0.0
    %569 = vmatpush1.msra.mxu0 0.0
    %570 = vmatprep.subr.mxu0 0.0
    %571 = vmatpush1.msra.mxu0 0.0
    %572 = vmatprep.subr.mxu0 0.0
    %573 = vmatpush1.msra.mxu0 0.0
    %574 = vmatprep.subr.mxu0 0.0
    %575 = vmatpush1.msra.mxu0 0.0
    %576 = vmatprep.subr.mxu0 0.0
    %577 = vmatpush1.msra.mxu0 0.0
    %578 = vmatprep.subr.mxu0 0.0
    %579 = vmatpush1.msra.mxu0 0.0
    %580 = vmatprep.subr.mxu0 0.0
    %581 = vmatpush1.msra.mxu0 0.0
    %582 = vmatprep.subr.mxu0 0.0
    %583 = vmatpush1.msra.mxu0 0.0
    %584 = vmatprep.subr.mxu0 0.0
    %585 = vmatpush1.msra.mxu0 0.0
    %586 = vmatprep.subr.mxu0 0.0
    %587 = vmatpush1.msra.mxu0 0.0
    %588 = vmatprep.subr.mxu0 0.0
    %589 = vmatpush1.msra.mxu0 0.0
    %590 = vmatprep.subr.mxu0 0.0
    %591 = vmatpush1.msra.mxu0 0.0
    %592 = vmatprep.mubr.f32.mxu0 0.0
    %593 = vmatmul.mubr.f32.gmra.mrb[0].mxu0 %v526
    %v594 = vpop.f32.mrb[0].mxu0
    %v595 = vadd.f32 0.0, %v594
    %v596 = vpop.f32.mrb[0].mxu0
    %597 = vdwg.mxu0
    %v598 = vadd.f32 %v68, %v595
    %v599 = vtanh.pop %v598
    %v600 = vld [vmem:[#allocation7] sm:$0xff]
    %v601 = vld [vmem:[#allocation7 + $0x8] sm:$0xf]
    %v602 = vld [vmem:[%s3] sm:$0x1]
    %v604 = vlaneseq
    %v605 = vshrl.u32 %v604, 7
    %v606 = vsub.s32 0, %v605
    %v607 = vrot.slane %v602, %v606
    %v610 = vsel %vm70, %v599, 0
    %v613 = vsel %vm74, %v601, 0
    %615 = vmatprep.subr.mxu0 0.0
    %616 = vmatpush1.msra.mxu0 %v600
    %617 = vmatprep.subr.mxu0 0.0
    %618 = vmatpush1.msra.mxu0 %v613
    %619 = vmatprep.subr.mxu0 0.0
    %620 = vmatpush1.msra.mxu0 0.0
    %621 = vmatprep.subr.mxu0 0.0
    %622 = vmatpush1.msra.mxu0 0.0
    %623 = vmatprep.subr.mxu0 0.0
    %624 = vmatpush1.msra.mxu0 0.0
    %625 = vmatprep.subr.mxu0 0.0
    %626 = vmatpush1.msra.mxu0 0.0
    %627 = vmatprep.subr.mxu0 0.0
    %628 = vmatpush1.msra.mxu0 0.0
    %629 = vmatprep.subr.mxu0 0.0
    %630 = vmatpush1.msra.mxu0 0.0
    %631 = vmatprep.subr.mxu0 0.0
    %632 = vmatpush1.msra.mxu0 0.0
    %633 = vmatprep.subr.mxu0 0.0
    %634 = vmatpush1.msra.mxu0 0.0
    %635 = vmatprep.subr.mxu0 0.0
    %636 = vmatpush1.msra.mxu0 0.0
    %637 = vmatprep.subr.mxu0 0.0
    %638 = vmatpush1.msra.mxu0 0.0
    %639 = vmatprep.subr.mxu0 0.0
    %640 = vmatpush1.msra.mxu0 0.0
    %641 = vmatprep.subr.mxu0 0.0
    %642 = vmatpush1.msra.mxu0 0.0
    %643 = vmatprep.subr.mxu0 0.0
    %644 = vmatpush1.msra.mxu0 0.0
    %645 = vmatprep.subr.mxu0 0.0
    %646 = vmatpush1.msra.mxu0 0.0
    %647 = vmatprep.subr.mxu0 0.0
    %648 = vmatpush1.msra.mxu0 0.0
    %649 = vmatprep.subr.mxu0 0.0
    %650 = vmatpush1.msra.mxu0 0.0
    %651 = vmatprep.subr.mxu0 0.0
    %652 = vmatpush1.msra.mxu0 0.0
    %653 = vmatprep.subr.mxu0 0.0
    %654 = vmatpush1.msra.mxu0 0.0
    %655 = vmatprep.subr.mxu0 0.0
    %656 = vmatpush1.msra.mxu0 0.0
    %657 = vmatprep.subr.mxu0 0.0
    %658 = vmatpush1.msra.mxu0 0.0
    %659 = vmatprep.subr.mxu0 0.0
    %660 = vmatpush1.msra.mxu0 0.0
    %661 = vmatprep.subr.mxu0 0.0
    %662 = vmatpush1.msra.mxu0 0.0
    %663 = vmatprep.subr.mxu0 0.0
    %664 = vmatpush1.msra.mxu0 0.0
    %665 = vmatprep.subr.mxu0 0.0
    %666 = vmatpush1.msra.mxu0 0.0
    %667 = vmatprep.subr.mxu0 0.0
    %668 = vmatpush1.msra.mxu0 0.0
    %669 = vmatprep.subr.mxu0 0.0
    %670 = vmatpush1.msra.mxu0 0.0
    %671 = vmatprep.subr.mxu0 0.0
    %672 = vmatpush1.msra.mxu0 0.0
    %673 = vmatprep.subr.mxu0 0.0
    %674 = vmatpush1.msra.mxu0 0.0
    %675 = vmatprep.subr.mxu0 0.0
    %676 = vmatpush1.msra.mxu0 0.0
    %677 = vmatprep.subr.mxu0 0.0
    %678 = vmatpush1.msra.mxu0 0.0
    %679 = vmatprep.mubr.f32.mxu0 0.0
    %680 = vmatmul.mubr.f32.gmra.mrb[0].mxu0 %v610
    %v681 = vpop.f32.mrb[0].mxu0
    %v682 = vadd.f32 %v607, %v681
    %v683 = vpop.f32.mrb[0].mxu0
    %684 = vdwg.mxu0
    %vm685 = vcmask 72704
    %686 = vst.msk [vmem:[#allocation8] sm:$0xff] %vm685, %v682
    // Predicated region
    $region30: #{tpu_custom_call.1} parent=1 // pred_check
      _
    $region31: #{tpu_custom_call.1} parent=1 // pred_check_branch
      %688 = sbr.rel (0) target = $region33
    $region32: #{tpu_custom_call.1} parent=1 // pred_region
      %s690 = ssub.s32 128, 128
      %691 = vsyncadd [#allocation4], %s690
      %s693 = sshll.u32 [#allocation8], 4
      %s694 = int_to_ptr.vmem [resolvable:$true] %s693
      %696 = dma.vmem_to_hbm [thread:$0]  %s694, 128, %s4, [#allocation4]
    $region33: #{tpu_custom_call.1} parent=1 // pred_fallthru
      _
    // Predicated region
    $region34: #{tpu_custom_call.1} parent=1 // pred_check
      _
    $region35: #{tpu_custom_call.1} parent=1 // pred_check_branch
      %698 = sbr.rel (0) target = $region37
    $region36: #{tpu_custom_call.1} parent=1 // pred_region
      %699 = dma.done [#allocation4], 128
    $region37: #{tpu_custom_call.1} parent=1 // pred_fallthru
      _
    %700 = vsyncpa [#allocation3], 1
    %701 = vsyncpa [#allocation6], 1
    %702 = vsyncpa [#allocation4], 1

</llo_original>
